<compile_context>
chip_gen: v5e
topology: v5e:2x2
jax: 0.10.0
libtpu: 0.0.40
codegen_flags: <defaults>
</compile_context>

<pallas_src>
import functools

import jax
import jax.numpy as jnp
from jax import lax
from jax.experimental import pallas as pl
from jax.experimental.pallas import tpu as pltpu


# Working-set budget that fits comfortably inside v7x's 64 MiB VMEM while
# allowing far larger tiles than the default scoped limit (16/32 MiB).
_VMEM_TILE_BUDGET = 40 * 1024 * 1024
_VMEM_LIMIT_BYTES = 48 * 1024 * 1024

_TM_CANDIDATES = (256, 128, 64, 32, 16, 8)
# Large, 256-aligned K tiles (match the 2x256^2 MXU on v6e/v7x); 128 is the
# v5e-friendly fallback.  Full-K is always a legal last resort.
_TK_CANDIDATES = (2048, 1792, 1536, 1280, 1024, 768, 512, 256, 128)


def _pick_tm(M):
    for c in _TM_CANDIDATES:
        if M % c == 0:
            return c
    return M


def _pick_tk(M, K, itemsize, resident_bytes, extra_per_tk_rows=0):
    """Largest K tile whose double-buffered working set fits the VMEM budget."""

    def est(tk):
        return 2 * (M + extra_per_tk_rows) * tk * itemsize + resident_bytes

    tk = K  # full-K block is always layout-legal (handles K % 128 != 0)
    for c in _TK_CANDIDATES:
        if K % c == 0 and est(c) <= _VMEM_TILE_BUDGET:
            tk = c
            break
    return tk


def _single_path_fits(M, K, itemsize, resident_bytes):
    tk_min = 128 if K % 128 == 0 else K
    return 2 * M * tk_min * itemsize + resident_bytes <= _VMEM_TILE_BUDGET


def _compiler_params(dim_sem):
    return pltpu.CompilerParams(
        dimension_semantics=dim_sem,
        vmem_limit_bytes=_VMEM_LIMIT_BYTES,
    )


# --------------------------------------------------------------------------
# Kernels
# --------------------------------------------------------------------------
def _gram_kernel_single(feat_ref, g_ref, *, inv_norm):
    """Gram(features)/norm, features streamed once over K (grid = (K//tk,))."""
    k = pl.program_id(0)

    @pl.when(k == 0)
    def _():
        g_ref[...] = jnp.zeros_like(g_ref)

    f = feat_ref[...]
    # (M, tk) . (M, tk) contracted on the last axes -> (M, M); no transpose.
    g_ref[...] += lax.dot_general(
        f, f,
        dimension_numbers=(((1,), (1,)), ((), ())),
        preferred_element_type=jnp.float32,
    )

    @pl.when(k == pl.num_programs(0) - 1)
    def _():
        g_ref[...] = g_ref[...] * inv_norm


def _gram_mse_kernel_single(feat_ref, tgt_ref, loss_ref, acc_ref, *,
                            inv_norm, inv_mse):
    """Fused Gram + MSE-vs-target; Gram never leaves VMEM (grid = (K//tk,))."""
    k = pl.program_id(0)

    @pl.when(k == 0)
    def _():
        acc_ref[...] = jnp.zeros_like(acc_ref)

    f = feat_ref[...]
    acc_ref[...] += lax.dot_general(
        f, f,
        dimension_numbers=(((1,), (1,)), ((), ())),
        preferred_element_type=jnp.float32,
    )

    @pl.when(k == pl.num_programs(0) - 1)
    def _():
        diff = acc_ref[...] * inv_norm - tgt_ref[...].astype(jnp.float32)
        sse = jnp.sum(diff * diff)
        # Spread the scalar over a lane-dense (8,128) block (unmasked store);
        # inv_mse folds the /(M*M) and the /(8*128) spreading factor.
        loss_ref[...] = jnp.full(loss_ref.shape, sse * inv_mse, jnp.float32)


def _gram_kernel_tiled(feat_row_ref, feat_col_ref, g_ref, *, inv_norm):
    """Row-tiled Gram fallback for large M (grid = (M//tm, K//tk))."""
    k = pl.program_id(1)

    @pl.when(k == 0)
    def _():
        g_ref[...] = jnp.zeros_like(g_ref)

    g_ref[...] += lax.dot_general(
        feat_row_ref[...], feat_col_ref[...],
        dimension_numbers=(((1,), (1,)), ((), ())),
        preferred_element_type=jnp.float32,
    )

    @pl.when(k == pl.num_programs(1) - 1)
    def _():
        g_ref[...] = g_ref[...] * inv_norm


def _gram_mse_kernel_tiled(feat_row_ref, feat_col_ref, tgt_ref, loss_ref,
                           acc_ref, *, inv_norm, inv_mse):
    """Row-tiled fused Gram + MSE fallback (grid = (M//tm, K//tk))."""
    k = pl.program_id(1)

    @pl.when(k == 0)
    def _():
        acc_ref[...] = jnp.zeros_like(acc_ref)

    acc_ref[...] += lax.dot_general(
        feat_row_ref[...], feat_col_ref[...],
        dimension_numbers=(((1,), (1,)), ((), ())),
        preferred_element_type=jnp.float32,
    )

    @pl.when(k == pl.num_programs(1) - 1)
    def _():
        diff = acc_ref[...] * inv_norm - tgt_ref[...].astype(jnp.float32)
        sse = jnp.sum(diff * diff)
        loss_ref[...] = jnp.full(loss_ref.shape, sse * inv_mse, jnp.float32)


# --------------------------------------------------------------------------
# Wrappers
# --------------------------------------------------------------------------
def _gram_single(features, norm):
    M, K = features.shape
    itemsize = jnp.dtype(features.dtype).itemsize
    resident = 2 * M * M * 4  # Gram output slab (double-buffered)
    tk = _pick_tk(M, K, itemsize, resident)
    kernel = functools.partial(_gram_kernel_single, inv_norm=1.0 / float(norm))
    return pl.pallas_call(
        kernel,
        out_shape=jax.ShapeDtypeStruct((M, M), jnp.float32),
        grid_spec=pltpu.PrefetchScalarGridSpec(
            num_scalar_prefetch=0,
            grid=(K // tk,),
            in_specs=[pl.BlockSpec((M, tk), lambda k: (0, k))],
            out_specs=pl.BlockSpec((M, M), lambda k: (0, 0)),  # resident across K
        ),
        compiler_params=_compiler_params(("arbitrary",)),
    )(features)


def _gram_tiled(features, norm, *, tm=None, tk=None):
    M, K = features.shape
    itemsize = jnp.dtype(features.dtype).itemsize
    if tm is None:
        tm = _pick_tm(M)
    if tk is None:
        resident = 2 * tm * M * 4
        tk = _pick_tk(M, K, itemsize, resident, extra_per_tk_rows=tm)
    kernel = functools.partial(_gram_kernel_tiled, inv_norm=1.0 / float(norm))
    return pl.pallas_call(
        kernel,
        out_shape=jax.ShapeDtypeStruct((M, M), jnp.float32),
        grid_spec=pltpu.PrefetchScalarGridSpec(
            num_scalar_prefetch=0,
            grid=(M // tm, K // tk),
            in_specs=[
                pl.BlockSpec((tm, tk), lambda i, k: (i, k)),  # row tile
                pl.BlockSpec((M, tk), lambda i, k: (0, k)),   # full-M column operand
            ],
            out_specs=pl.BlockSpec((tm, M), lambda i, k: (i, 0)),
        ),
        compiler_params=_compiler_params(("parallel", "arbitrary")),
    )(features, features)


def _gram(features, norm):
    M, K = features.shape
    itemsize = jnp.dtype(features.dtype).itemsize
    if _single_path_fits(M, K, itemsize, 2 * M * M * 4):
        return _gram_single(features, norm)
    return _gram_tiled(features, norm)


def _style_loss_single(features, target_gram, norm):
    M, K = features.shape
    itemsize = jnp.dtype(features.dtype).itemsize
    resident = 2 * M * M * 4 + M * M * 4  # target slab (dbl-buffered) + acc scratch
    tk = _pick_tk(M, K, itemsize, resident)
    kernel = functools.partial(
        _gram_mse_kernel_single,
        inv_norm=1.0 / float(norm),
        inv_mse=1.0 / (float(M) * float(M) * 8.0 * 128.0),
    )
    partial = pl.pallas_call(
        kernel,
        out_shape=jax.ShapeDtypeStruct((8, 128), jnp.float32),
        grid_spec=pltpu.PrefetchScalarGridSpec(
            num_scalar_prefetch=0,
            grid=(K // tk,),
            in_specs=[
                pl.BlockSpec((M, tk), lambda k: (0, k)),  # features, streamed once
                pl.BlockSpec((M, M), lambda k: (0, 0)),   # target Gram, fetched once
            ],
            out_specs=pl.BlockSpec((8, 128), lambda k: (0, 0)),
            scratch_shapes=[pltpu.VMEM((M, M), jnp.float32)],  # Gram stays in VMEM
        ),
        compiler_params=_compiler_params(("arbitrary",)),
    )(features, target_gram)
    return jnp.sum(partial)


def _style_loss_tiled(features, target_gram, norm, *, tm=None, tk=None):
    M, K = features.shape
    itemsize = jnp.dtype(features.dtype).itemsize
    if tm is None:
        tm = _pick_tm(M)
    if tk is None:
        resident = 2 * tm * M * 4 + tm * M * 4
        tk = _pick_tk(M, K, itemsize, resident, extra_per_tk_rows=tm)
    n_mb = M // tm
    kernel = functools.partial(
        _gram_mse_kernel_tiled,
        inv_norm=1.0 / float(norm),
        inv_mse=1.0 / (float(M) * float(M) * 8.0 * 128.0),
    )
    partial = pl.pallas_call(
        kernel,
        out_shape=jax.ShapeDtypeStruct((n_mb, 8, 128), jnp.float32),
        grid_spec=pltpu.PrefetchScalarGridSpec(
            num_scalar_prefetch=0,
            grid=(M // tm, K // tk),
            in_specs=[
                pl.BlockSpec((tm, tk), lambda i, k: (i, k)),  # row tile
                pl.BlockSpec((M, tk), lambda i, k: (0, k)),   # full-M column operand
                pl.BlockSpec((tm, M), lambda i, k: (i, 0)),   # target row slab
            ],
            out_specs=pl.BlockSpec((1, 8, 128), lambda i, k: (i, 0, 0)),
            scratch_shapes=[pltpu.VMEM((tm, M), jnp.float32)],
        ),
        compiler_params=_compiler_params(("parallel", "arbitrary")),
    )(features, features, target_gram)
    return jnp.sum(partial)  # tiny wrapper-side reduce over row-block partials


def _style_loss(features, target_gram, norm):
    M, K = features.shape
    itemsize = jnp.dtype(features.dtype).itemsize
    if _single_path_fits(M, K, itemsize, 2 * M * M * 4 + M * M * 4):
        return _style_loss_single(features, target_gram, norm)
    return _style_loss_tiled(features, target_gram, norm)


# --------------------------------------------------------------------------
# Public module
# --------------------------------------------------------------------------
def gram_matrix(x):
    """Pallas-backed gram_matrix for NCHW input x."""
    a, b, c, d = x.shape
    feats = x.reshape(a * b, c * d)
    return _gram(feats, a * b * c * d)


class StyleLoss:
    """JAX/Pallas port of the PyTorch StyleLoss module."""

    def __init__(self, target_feature):
        # Parameter setup: target Gram matrix, computed once (detached).
        self.target = gram_matrix(target_feature)
        self.loss = None

    def __call__(self, x):
        a, b, c, d = x.shape
        feats = x.reshape(a * b, c * d)
        self.loss = _style_loss(feats, self.target, a * b * c * d)
        return x  # forward returns the input unchanged (loss stored on self)


if __name__ == "__main__":
    key = jax.random.PRNGKey(0)
    k_tgt, k_in, k_t2, k_x2 = jax.random.split(key, 4)

    def gram_ref(t):
        aa, bb, cc, dd = t.shape
        f = t.reshape(aa * bb, cc * dd).astype(jnp.float32)
        return (f @ f.T) / (aa * bb * cc * dd)

    # --- Module-level test (single-operand fast path) ------------------------
    a, b, c, d = 2, 4, 16, 16
    target_feature = jax.random.normal(k_tgt, (a, b, c, d), dtype=jnp.float32)
    x = jax.random.normal(k_in, (a, b, c, d), dtype=jnp.float32)

    module = StyleLoss(target_feature)
    out = jax.block_until_ready(module(x))
    loss = jax.block_until_ready(module.loss)
    target = jax.block_until_ready(module.target)

    g_t_ref = gram_ref(target_feature)
    g_x_ref = gram_ref(x)
    loss_ref = jnp.mean((g_x_ref - g_t_ref) ** 2)

    assert out.shape == x.shape
    assert jnp.allclose(out, x)                                   # forward returns input
    assert jnp.allclose(target, g_t_ref, rtol=1e-5, atol=1e-5)
    assert jnp.allclose(loss, loss_ref, rtol=1e-4, atol=1e-6)

    # --- Coverage of the large-M row-tiled fallback (forced small tiles) -----
    a2, b2, c2, d2 = 2, 8, 16, 16                 # M = 16, K = 256
    tf2 = jax.random.normal(k_t2, (a2, b2, c2, d2), dtype=jnp.float32)
    x2 = jax.random.normal(k_x2, (a2, b2, c2, d2), dtype=jnp.float32)
    norm2 = a2 * b2 * c2 * d2
    f_t2 = tf2.reshape(a2 * b2, c2 * d2)
    f_x2 = x2.reshape(a2 * b2, c2 * d2)

    g_t2 = jax.block_until_ready(_gram_tiled(f_t2, norm2, tm=8, tk=128))
    loss2 = jax.block_until_ready(_style_loss_tiled(f_x2, g_t2, norm2, tm=8, tk=128))

    g_t2_ref = gram_ref(tf2)
    g_x2_ref = gram_ref(x2)
    loss2_ref = jnp.mean((g_x2_ref - g_t2_ref) ** 2)

    assert jnp.allclose(g_t2, g_t2_ref, rtol=1e-5, atol=1e-5)
    assert jnp.allclose(loss2, loss2_ref, rtol=1e-4, atol=1e-6)

    print("KERNEL_OK")
</pallas_src>

<mosaic_0001>
module attributes {stable_mosaic.version = 11 : i64} {
  func.func @_gram_kernel_single(%arg0: i32, %arg1: memref<8x256xf32, #tpu.memory_space<vmem>>, %arg2: memref<8x8xf32, #tpu.memory_space<vmem>>) attributes {dimension_semantics = [#tpu.dimension_semantics<arbitrary>], iteration_bounds = array<i64: 1>, scalar_prefetch = 0 : i64, scratch_operands = 0 : i64, tpu.core_type = #tpu.core_type<tc>, window_params = [{transform_indices = @transform_0, window_bounds = array<i64: 8, 256>}, {pipeline_mode = #tpu.pipeline_mode<synchronous>, transform_indices = @transform_1, window_bounds = array<i64: 8, 8>}]} {
    %c0_i32 = arith.constant 0 : i32
    %0 = arith.cmpi eq, %arg0, %c0_i32 : i32
    %1 = arith.extui %0 : i1 to i32
    %c0_i32_0 = arith.constant 0 : i32
    %2 = arith.cmpi ne, %1, %c0_i32_0 : i32
    scf.if %2 {
      %cst_8 = arith.constant 0.000000e+00 : f32
      %11 = vector.broadcast %cst_8 : f32 to vector<8x8xf32>
      %c0_9 = arith.constant 0 : index
      %c0_10 = arith.constant 0 : index
      %12 = vector.load %arg2[%c0_9, %c0_10] : memref<8x8xf32, #tpu.memory_space<vmem>>, vector<8x8xf32>
      tpu.vector_store %arg2[%c0_9, %c0_10], %11 {strides = array<i32>} : memref<8x8xf32, #tpu.memory_space<vmem>>, vector<8x8xf32>,
    } else {
    }
    %c0 = arith.constant 0 : index
    %c0_1 = arith.constant 0 : index
    %3 = vector.load %arg1[%c0, %c0_1] : memref<8x256xf32, #tpu.memory_space<vmem>>, vector<8x256xf32>
    %c0_2 = arith.constant 0 : index
    %c0_3 = arith.constant 0 : index
    %4 = vector.load %arg2[%c0_2, %c0_3] : memref<8x8xf32, #tpu.memory_space<vmem>>, vector<8x8xf32>
    %cst = arith.constant dense<0.000000e+00> : vector<8x8xf32>
    %5 = tpu.matmul %3, %3, %cst {dimension_numbers = #tpu.dot_dimension_numbers<[1], [1], [0], [0], [0, 0, 1, 0], [], []>} : vector<8x256xf32>, vector<8x256xf32>, vector<8x8xf32> -> vector<8x8xf32>
    %6 = arith.addf %4, %5 : vector<8x8xf32>
    %c0_4 = arith.constant 0 : index
    %c0_5 = arith.constant 0 : index
    %7 = vector.load %arg2[%c0_4, %c0_5] : memref<8x8xf32, #tpu.memory_space<vmem>>, vector<8x8xf32>
    tpu.vector_store %arg2[%c0_4, %c0_5], %6 {strides = array<i32>} : memref<8x8xf32, #tpu.memory_space<vmem>>, vector<8x8xf32>,
    %c0_i32_6 = arith.constant 0 : i32
    %8 = arith.cmpi eq, %arg0, %c0_i32_6 : i32
    %9 = arith.extui %8 : i1 to i32
    %c0_i32_7 = arith.constant 0 : i32
    %10 = arith.cmpi ne, %9, %c0_i32_7 : i32
    scf.if %10 {
      %c0_8 = arith.constant 0 : index
      %c0_9 = arith.constant 0 : index
      %11 = vector.load %arg2[%c0_8, %c0_9] : memref<8x8xf32, #tpu.memory_space<vmem>>, vector<8x8xf32>
      %cst_10 = arith.constant 4.8828125E-4 : f32
      %12 = vector.broadcast %cst_10 : f32 to vector<8x8xf32>
      %13 = arith.mulf %11, %12 : vector<8x8xf32>
      %c0_11 = arith.constant 0 : index
      %c0_12 = arith.constant 0 : index
      %14 = vector.load %arg2[%c0_11, %c0_12] : memref<8x8xf32, #tpu.memory_space<vmem>>, vector<8x8xf32>
      tpu.vector_store %arg2[%c0_11, %c0_12], %13 {strides = array<i32>} : memref<8x8xf32, #tpu.memory_space<vmem>>, vector<8x8xf32>,
    } else {
    }
    return
  }
  func.func @transform_0(%arg0: i32) -> (i32, i32) {
    %c0_i32 = arith.constant 0 : i32
    %c0_i32_0 = arith.constant 0 : i32
    return %c0_i32, %arg0 : i32, i32
  }
  func.func @transform_1(%arg0: i32) -> (i32, i32) {
    %c0_i32 = arith.constant 0 : i32
    %c0_i32_0 = arith.constant 0 : i32
    %c0_i32_1 = arith.constant 0 : i32
    return %c0_i32, %c0_i32_0 : i32, i32
  }
}

</mosaic_0001>

<llo_original>
// kernel: tpu_custom_call.1
$region0: #{tpu_custom_call.1}
  #allocation0 [shape = 'u32[]', space=smem, size = 0x4, offset = 0x4, fixed_abs, tag = 'smem constant byte address 0x4 - core index']
  #allocation1 [shape = 'u32[72,128]{1,0:T(1,128)}', space=vmem, size = 0x9000, scoped, tag = 'internal scratch']
  %s0 = inlined_call_operand.hbm [shape: f32[8,256], index: 0, kind: input, shape index: {}]
  %s1 = inlined_call_operand.hbm [shape: f32[8,8], index: 1, kind: output, shape index: {}]
  %s2 = sld [smem:[#allocation0]]
  $region26: #{tpu_custom_call.1} parent=0
    _
  %s4 = ssub.s32 1, %s2
  %s5 = scalar_select 0, %s4, %s2
  $region1: #{tpu_custom_call.1} parent=0
    #allocation2 [shape = 'u8[8192]{0}', space=vmem, size = 0x2000, scoped, tag = 'input window, operand 0, single buffered']
    #allocation3 [shape = 's32[1]{0}', space=sflag, size = 0x4, scoped, tag = 'scoped memory for tpu_custom_call.1']
    #allocation4 [shape = 's32[1]{0}', space=sflag, size = 0x4, scoped, tag = 'scoped memory for tpu_custom_call.1']
    #allocation5 [shape = 'u8[4096]{0}', space=vmem, size = 0x1000, scoped, tag = 'output window, operand 0, single buffered']
    %6 = vsyncpa [#allocation3], 0
    %7 = vsyncpa [#allocation4], 0
    // Predicated region
    $region2: #{tpu_custom_call.1} parent=1 // pred_check
      _
    $region3: #{tpu_custom_call.1} parent=1 // pred_check_branch
      %9 = sbr.rel (0) target = $region5
    $region4: #{tpu_custom_call.1} parent=1 // pred_region
      %11 = vsyncadd [#allocation3], 0
      %s13 = sshll.u32 %s0, 4
      %s14 = int_to_ptr.hbm [resolvable:$true] %s13
      %s15 = sshll.u32 [#allocation2], 4
      %s16 = int_to_ptr.vmem [resolvable:$true] %s15
      %18 = dma.hbm_to_vmem [thread:$0]  %s14, 256, %s16, [#allocation3]
    $region5: #{tpu_custom_call.1} parent=1 // pred_fallthru
      _
    // Predicated region
    $region6: #{tpu_custom_call.1} parent=1 // pred_check
      _
    $region7: #{tpu_custom_call.1} parent=1 // pred_check_branch
      %20 = sbr.rel (0) target = $region9
    $region8: #{tpu_custom_call.1} parent=1 // pred_region
      %22 = dma.done [#allocation3], 256
    $region9: #{tpu_custom_call.1} parent=1 // pred_fallthru
      _
    %p23 = scmp.eq.s32.totalorder 0, 0
    // Predicated region
    $region10: #{tpu_custom_call.1} parent=1 // pred_check
      %p24 = pneg %p23
    $region11: #{tpu_custom_call.1} parent=1 // pred_check_branch
      %26 = sbr.rel (%p24) target = $region13
    $region12: #{tpu_custom_call.1} parent=1 // pred_region
      %vm27 = vcmask 64512
      %28 = vst.msk [vmem:[#allocation5] sm:$0xff] %vm27, 0.0
    $region13: #{tpu_custom_call.1} parent=1 // pred_fallthru
      _
    %v29 = vld [vmem:[#allocation2] sm:$0xff]
    %v30 = vld [vmem:[#allocation2 + $0x8] sm:$0xff]
    %v31 = vld [vmem:[#allocation5] sm:$0xff]
    %32 = vmatpush.xpose.msra.mxu0 0.0
    %33 = vmatpush.xpose.msra.mxu0 0.0
    %34 = vmatpush.xpose.msra.mxu0 0.0
    %35 = vmatpush.xpose.msra.mxu0 0.0
    %36 = vmatpush.xpose.msra.mxu0 0.0
    %37 = vmatpush.xpose.msra.mxu0 0.0
    %38 = vmatpush.xpose.msra.mxu0 0.0
    %39 = vmatpush.xpose.msra.mxu0 0.0
    %40 = vmatpush.xpose.msra.mxu0 0.0
    %41 = vmatpush.xpose.msra.mxu0 0.0
    %42 = vmatpush.xpose.msra.mxu0 0.0
    %43 = vmatpush.xpose.msra.mxu0 0.0
    %44 = vmatpush.xpose.msra.mxu0 0.0
    %45 = vmatpush.xpose.msra.mxu0 0.0
    %46 = vmatpush.xpose.msra.mxu0 0.0
    %47 = vmatpush.xpose.msra.mxu0 %v29
    %48 = vmatmul.f32.gmra.mxu0 %v29
    %v49 = vpop.f32.mrf.mxu0
    %v50 = vadd.f32 0.0, %v49
    %51 = vdwg.mxu0
    %52 = vmatpush.xpose.msra.mxu0 0.0
    %53 = vmatpush.xpose.msra.mxu0 0.0
    %54 = vmatpush.xpose.msra.mxu0 0.0
    %55 = vmatpush.xpose.msra.mxu0 0.0
    %56 = vmatpush.xpose.msra.mxu0 0.0
    %57 = vmatpush.xpose.msra.mxu0 0.0
    %58 = vmatpush.xpose.msra.mxu0 0.0
    %59 = vmatpush.xpose.msra.mxu0 0.0
    %60 = vmatpush.xpose.msra.mxu0 0.0
    %61 = vmatpush.xpose.msra.mxu0 0.0
    %62 = vmatpush.xpose.msra.mxu0 0.0
    %63 = vmatpush.xpose.msra.mxu0 0.0
    %64 = vmatpush.xpose.msra.mxu0 0.0
    %65 = vmatpush.xpose.msra.mxu0 0.0
    %66 = vmatpush.xpose.msra.mxu0 0.0
    %67 = vmatpush.xpose.msra.mxu0 %v30
    %68 = vmatmul.f32.gmra.mxu0 %v30
    %v69 = vpop.f32.mrf.mxu0
    %v70 = vadd.f32 %v50, %v69
    %71 = vdwg.mxu0
    %v72 = vadd.f32 %v31, %v70
    %vm73 = vcmask 64512
    %74 = vst.msk [vmem:[#allocation5] sm:$0xff] %vm73, %v72
    // Predicated region
    $region14: #{tpu_custom_call.1} parent=1 // pred_check
      %p75 = pneg %p23
    $region15: #{tpu_custom_call.1} parent=1 // pred_check_branch
      %77 = sbr.rel (%p75) target = $region17
    $region16: #{tpu_custom_call.1} parent=1 // pred_region
      %v78 = vld [vmem:[#allocation5] sm:$0xff]
      %v79 = vmul.f32 %v78, 0.00048828125
      %80 = vst.msk [vmem:[#allocation5] sm:$0xff] %vm73, %v79
    $region17: #{tpu_custom_call.1} parent=1 // pred_fallthru
      _
    // Predicated region
    $region18: #{tpu_custom_call.1} parent=1 // pred_check
      _
    $region19: #{tpu_custom_call.1} parent=1 // pred_check_branch
      %82 = sbr.rel (0) target = $region21
    $region20: #{tpu_custom_call.1} parent=1 // pred_region
      %84 = vsyncadd [#allocation4], 0
      %s86 = sshll.u32 [#allocation5], 4
      %s87 = int_to_ptr.vmem [resolvable:$true] %s86
      %s88 = sshll.u32 %s1, 4
      %s89 = int_to_ptr.hbm [resolvable:$true] %s88
      %91 = dma.vmem_to_hbm [thread:$0]  %s87, 128, %s89, [#allocation4]
    $region21: #{tpu_custom_call.1} parent=1 // pred_fallthru
      _
    // Predicated region
    $region22: #{tpu_custom_call.1} parent=1 // pred_check
      _
    $region23: #{tpu_custom_call.1} parent=1 // pred_check_branch
      %93 = sbr.rel (0) target = $region25
    $region24: #{tpu_custom_call.1} parent=1 // pred_region
      %95 = dma.done [#allocation4], 128
    $region25: #{tpu_custom_call.1} parent=1 // pred_fallthru
      _
    %96 = vsyncpa [#allocation3], 1
    %97 = vsyncpa [#allocation4], 1

</llo_original>
